<compile_context>
chip_gen: v7x
topology: tpu7x:2x2x1
jax: 0.10.0
libtpu: 0.0.40
codegen_flags: <defaults>
</compile_context>

<pallas_src>
import functools

import jax
import jax.numpy as jnp
from jax.experimental import pallas as pl
from jax.experimental.pallas import tpu as pltpu


def attention_kernel(z_ref, w1_ref, b1_ref, w2_ref, out_ref, beta_ref):
    """One row-slab of the Attention forward.

    z_ref   : (TN, M*D)  row slab, views concatenated along lanes
    w1_ref  : (D, H)     first Linear weight
    b1_ref  : (1, H)     first Linear bias
    w2_ref  : (1, H)     second Linear weight (no bias)
    out_ref : (TN, D)    (beta * z).sum(view axis)
    beta_ref: (TN, M)    attention weights (reshaped to (N, M, 1) by wrapper)
    """
    feat = out_ref.shape[1]          # D
    num_views = beta_ref.shape[1]    # M

    w1 = w1_ref[...]                 # (D, H)
    b1 = b1_ref[...]                 # (1, H)
    w2 = w2_ref[...]                 # (1, H)

    # Per-view feature slabs (static lane slices of the (TN, M*D) block).
    zs = [z_ref[:, pl.ds(j * feat, feat)] for j in range(num_views)]  # (TN, D)

    # Per-view projection scores: s_j = tanh(z_j @ W1 + b1) . w2
    scores = []
    for j in range(num_views):
        hj = jnp.tanh(
            jnp.dot(zs[j], w1, preferred_element_type=jnp.float32) + b1
        )                                                     # (TN, H)
        scores.append(jnp.sum(hj * w2, axis=-1, keepdims=True))  # (TN, 1)

    # Softmax over the (small) view axis, elementwise over the unrolled list.
    s_max = scores[0]
    for sj in scores[1:]:
        s_max = jnp.maximum(s_max, sj)
    exps = [jnp.exp(sj - s_max) for sj in scores]
    denom = exps[0]
    for ej in exps[1:]:
        denom = denom + ej
    inv = 1.0 / denom                                          # (TN, 1)

    # Weighted sum over views + write beta columns.
    acc = jnp.zeros(out_ref.shape, jnp.float32)
    for j in range(num_views):
        beta_j = exps[j] * inv                                 # (TN, 1)
        beta_ref[:, pl.ds(j, 1)] = beta_j.astype(beta_ref.dtype)
        acc = acc + beta_j * zs[j]
    out_ref[...] = acc.astype(out_ref.dtype)


@functools.partial(jax.jit, static_argnames=("block_n",))
def attention_forward(z, w1, b1, w2, *, block_n=256):
    """z: (N, M, D); w1: (D, H); b1: (H,); w2: (H,).  Returns ((N, D), (N, M, 1))."""
    n, m, d = z.shape
    h = w1.shape[1]

    block_n = min(block_n, n)
    n_pad = pl.cdiv(n, block_n) * block_n

    # Free trailing-dim merge (bitcast): (N, M, D) -> (N, M*D).  No transpose,
    # no extra HBM round trip; padded rows (if any) are benign (row-independent).
    z2d = z.astype(jnp.float32).reshape(n, m * d)
    if n_pad != n:
        z2d = jnp.pad(z2d, ((0, n_pad - n), (0, 0)))

    w1_f = w1.astype(jnp.float32)
    b1_2d = b1.reshape(1, h).astype(jnp.float32)
    w2_2d = w2.reshape(1, h).astype(jnp.float32)

    out, beta = pl.pallas_call(
        attention_kernel,
        out_shape=(
            jax.ShapeDtypeStruct((n_pad, d), jnp.float32),
            jax.ShapeDtypeStruct((n_pad, m), jnp.float32),
        ),
        grid=(n_pad // block_n,),
        in_specs=[
            pl.BlockSpec((block_n, m * d), lambda i: (i, 0)),
            pl.BlockSpec((d, h), lambda i: (0, 0)),
            pl.BlockSpec((1, h), lambda i: (0, 0)),
            pl.BlockSpec((1, h), lambda i: (0, 0)),
        ],
        out_specs=(
            pl.BlockSpec((block_n, d), lambda i: (i, 0)),
            pl.BlockSpec((block_n, m), lambda i: (i, 0)),
        ),
        compiler_params=pltpu.CompilerParams(
            dimension_semantics=("parallel",),
        ),
        cost_estimate=pl.CostEstimate(
            flops=2 * n_pad * m * d * h + 4 * n_pad * m * h + 4 * n_pad * m * d,
            transcendentals=n_pad * m * (h + 1),   # tanh + exp
            bytes_accessed=4 * (n_pad * m * d + n_pad * d + n_pad * m + d * h + 2 * h),
        ),
    )(z2d, w1_f, b1_2d, w2_2d)

    return out[:n], beta[:n].reshape(n, m, 1)


def _reference(z, w1, b1, w2):
    """Pure-JAX reference mirroring the PyTorch forward."""
    zf = z.astype(jnp.float32)
    hid = jnp.tanh(jnp.einsum("nmd,dh->nmh", zf, w1.astype(jnp.float32)) + b1)
    s = jnp.sum(hid * w2.reshape(1, 1, -1), axis=-1, keepdims=True)   # (N, M, 1)
    beta = jax.nn.softmax(s, axis=1)
    out = jnp.sum(beta * zf, axis=1)
    return out, beta


if __name__ == "__main__":
    # Small shapes consistent with the module: N samples, M=2 views (the dim
    # the softmax runs over), in_size=32, hidden_size=16.
    N, M, D, H = 256, 2, 32, 16

    key = jax.random.PRNGKey(0)
    kz, k1, kb, k2 = jax.random.split(key, 4)

    # Round inputs to bf16-representable f32 so the tiny MXU matmul gives the
    # same products regardless of the f32-emulation path chosen by the backend.
    def _bf16_grid(x):
        return x.astype(jnp.bfloat16).astype(jnp.float32)

    z = _bf16_grid(jax.random.normal(kz, (N, M, D), dtype=jnp.float32))
    w1 = _bf16_grid(0.3 * jax.random.normal(k1, (D, H), dtype=jnp.float32))
    b1 = _bf16_grid(0.1 * jax.random.normal(kb, (H,), dtype=jnp.float32))
    w2 = _bf16_grid(0.3 * jax.random.normal(k2, (H,), dtype=jnp.float32))

    out, beta = attention_forward(z, w1, b1, w2, block_n=128)
    jax.block_until_ready((out, beta))

    ref_out, ref_beta = _reference(z, w1, b1, w2)

    assert out.shape == (N, D), out.shape
    assert beta.shape == (N, M, 1), beta.shape
    assert jnp.allclose(out, ref_out, atol=1e-4, rtol=1e-4), "out mismatch vs reference"
    assert jnp.allclose(beta, ref_beta, atol=1e-4, rtol=1e-4), "beta mismatch vs reference"
    # beta rows must sum to 1 (softmax sanity)
    assert jnp.allclose(jnp.sum(beta, axis=1), 1.0, atol=1e-5), "beta rows do not sum to 1"

    print("KERNEL_OK")
</pallas_src>

<mosaic_0001>
module attributes {stable_mosaic.version = 11 : i64} {
  func.func @attention_kernel(%arg0: i32, %arg1: memref<128x64xf32, #tpu.memory_space<vmem>>, %arg2: memref<32x16xf32, #tpu.memory_space<vmem>>, %arg3: memref<1x16xf32, #tpu.memory_space<vmem>>, %arg4: memref<1x16xf32, #tpu.memory_space<vmem>>, %arg5: memref<128x32xf32, #tpu.memory_space<vmem>>, %arg6: memref<128x2xf32, #tpu.memory_space<vmem>>) attributes {dimension_semantics = [#tpu.dimension_semantics<parallel>], iteration_bounds = array<i64: 2>, scalar_prefetch = 0 : i64, scratch_operands = 0 : i64, tpu.core_type = #tpu.core_type<tc>, window_params = [{transform_indices = @transform_0, window_bounds = array<i64: 128, 64>}, {pipeline_mode = #tpu.pipeline_mode<synchronous>, transform_indices = @transform_1, window_bounds = array<i64: 32, 16>}, {pipeline_mode = #tpu.pipeline_mode<synchronous>, transform_indices = @transform_2, window_bounds = array<i64: 1, 16>}, {pipeline_mode = #tpu.pipeline_mode<synchronous>, transform_indices = @transform_3, window_bounds = array<i64: 1, 16>}, {transform_indices = @transform_4, window_bounds = array<i64: 128, 32>}, {transform_indices = @transform_5, window_bounds = array<i64: 128, 2>}]} {
    %c0 = arith.constant 0 : index
    %c0_0 = arith.constant 0 : index
    %0 = vector.load %arg2[%c0, %c0_0] : memref<32x16xf32, #tpu.memory_space<vmem>>, vector<32x16xf32>
    %c0_1 = arith.constant 0 : index
    %c0_2 = arith.constant 0 : index
    %1 = vector.load %arg3[%c0_1, %c0_2] : memref<1x16xf32, #tpu.memory_space<vmem>>, vector<1x16xf32>
    %c0_3 = arith.constant 0 : index
    %c0_4 = arith.constant 0 : index
    %2 = vector.load %arg4[%c0_3, %c0_4] : memref<1x16xf32, #tpu.memory_space<vmem>>, vector<1x16xf32>
    %c0_5 = arith.constant 0 : index
    %c0_6 = arith.constant 0 : index
    %3 = vector.load %arg1[%c0_5, %c0_6] : memref<128x64xf32, #tpu.memory_space<vmem>>, vector<128x32xf32>
    %c0_7 = arith.constant 0 : index
    %c32 = arith.constant 32 : index
    %4 = vector.load %arg1[%c0_7, %c32] : memref<128x64xf32, #tpu.memory_space<vmem>>, vector<128x32xf32>
    %cst = arith.constant dense<0.000000e+00> : vector<128x16xf32>
    %5 = tpu.matmul %3, %0, %cst {dimension_numbers = #tpu.dot_dimension_numbers<[1], [0], [0], [1], [0, 0, 1, 1], [], []>} : vector<128x32xf32>, vector<32x16xf32>, vector<128x16xf32> -> vector<128x16xf32>
    %6 = vector.broadcast %1 : vector<1x16xf32> to vector<128x16xf32>
    %7 = arith.addf %5, %6 : vector<128x16xf32>
    %8 = math.tanh %7 : vector<128x16xf32>
    %9 = vector.broadcast %2 : vector<1x16xf32> to vector<128x16xf32>
    %10 = arith.mulf %8, %9 : vector<128x16xf32>
    %cst_8 = arith.constant dense<0.000000e+00> : vector<128xf32>
    %11 = vector.multi_reduction <add>, %10, %cst_8 [1] : vector<128x16xf32> to vector<128xf32>
    %12 = vector.shape_cast %11 : vector<128xf32> to vector<128x1xf32>
    %cst_9 = arith.constant dense<0.000000e+00> : vector<128x16xf32>
    %13 = tpu.matmul %4, %0, %cst_9 {dimension_numbers = #tpu.dot_dimension_numbers<[1], [0], [0], [1], [0, 0, 1, 1], [], []>} : vector<128x32xf32>, vector<32x16xf32>, vector<128x16xf32> -> vector<128x16xf32>
    %14 = vector.broadcast %1 : vector<1x16xf32> to vector<128x16xf32>
    %15 = arith.addf %13, %14 : vector<128x16xf32>
    %16 = math.tanh %15 : vector<128x16xf32>
    %17 = vector.broadcast %2 : vector<1x16xf32> to vector<128x16xf32>
    %18 = arith.mulf %16, %17 : vector<128x16xf32>
    %cst_10 = arith.constant dense<0.000000e+00> : vector<128xf32>
    %19 = vector.multi_reduction <add>, %18, %cst_10 [1] : vector<128x16xf32> to vector<128xf32>
    %20 = vector.shape_cast %19 : vector<128xf32> to vector<128x1xf32>
    %21 = arith.maximumf %12, %20 : vector<128x1xf32>
    %22 = arith.subf %12, %21 : vector<128x1xf32>
    %23 = math.exp %22 : vector<128x1xf32>
    %24 = arith.subf %20, %21 : vector<128x1xf32>
    %25 = math.exp %24 : vector<128x1xf32>
    %26 = arith.addf %23, %25 : vector<128x1xf32>
    %cst_11 = arith.constant 1.000000e+00 : f32
    %27 = vector.broadcast %cst_11 : f32 to vector<128x1xf32>
    %28 = arith.divf %27, %26 : vector<128x1xf32>
    %cst_12 = arith.constant 0.000000e+00 : f32
    %29 = vector.broadcast %cst_12 : f32 to vector<128x32xf32>
    %30 = arith.mulf %23, %28 : vector<128x1xf32>
    %c0_13 = arith.constant 0 : index
    %c0_14 = arith.constant 0 : index
    %31 = vector.load %arg6[%c0_13, %c0_14] : memref<128x2xf32, #tpu.memory_space<vmem>>, vector<128x1xf32>
    tpu.vector_store %arg6[%c0_13, %c0_14], %30 {strides = array<i32>} : memref<128x2xf32, #tpu.memory_space<vmem>>, vector<128x1xf32>,
    %32 = vector.broadcast %30 : vector<128x1xf32> to vector<128x32xf32>
    %33 = arith.mulf %32, %3 : vector<128x32xf32>
    %34 = arith.addf %29, %33 : vector<128x32xf32>
    %35 = arith.mulf %25, %28 : vector<128x1xf32>
    %c0_15 = arith.constant 0 : index
    %c1 = arith.constant 1 : index
    %36 = vector.load %arg6[%c0_15, %c1] : memref<128x2xf32, #tpu.memory_space<vmem>>, vector<128x1xf32>
    tpu.vector_store %arg6[%c0_15, %c1], %35 {strides = array<i32>} : memref<128x2xf32, #tpu.memory_space<vmem>>, vector<128x1xf32>,
    %37 = vector.broadcast %35 : vector<128x1xf32> to vector<128x32xf32>
    %38 = arith.mulf %37, %4 : vector<128x32xf32>
    %39 = arith.addf %34, %38 : vector<128x32xf32>
    %c0_16 = arith.constant 0 : index
    %c0_17 = arith.constant 0 : index
    %40 = vector.load %arg5[%c0_16, %c0_17] : memref<128x32xf32, #tpu.memory_space<vmem>>, vector<128x32xf32>
    tpu.vector_store %arg5[%c0_16, %c0_17], %39 {strides = array<i32>} : memref<128x32xf32, #tpu.memory_space<vmem>>, vector<128x32xf32>,
    return
  }
  func.func @transform_0(%arg0: i32) -> (i32, i32) {
    %c0_i32 = arith.constant 0 : i32
    %c0_i32_0 = arith.constant 0 : i32
    return %arg0, %c0_i32 : i32, i32
  }
  func.func @transform_1(%arg0: i32) -> (i32, i32) {
    %c0_i32 = arith.constant 0 : i32
    %c0_i32_0 = arith.constant 0 : i32
    %c0_i32_1 = arith.constant 0 : i32
    return %c0_i32, %c0_i32_0 : i32, i32
  }
  func.func @transform_2(%arg0: i32) -> (i32, i32) {
    %c0_i32 = arith.constant 0 : i32
    %c0_i32_0 = arith.constant 0 : i32
    %c0_i32_1 = arith.constant 0 : i32
    return %c0_i32, %c0_i32_0 : i32, i32
  }
  func.func @transform_3(%arg0: i32) -> (i32, i32) {
    %c0_i32 = arith.constant 0 : i32
    %c0_i32_0 = arith.constant 0 : i32
    %c0_i32_1 = arith.constant 0 : i32
    return %c0_i32, %c0_i32_0 : i32, i32
  }
  func.func @transform_4(%arg0: i32) -> (i32, i32) {
    %c0_i32 = arith.constant 0 : i32
    %c0_i32_0 = arith.constant 0 : i32
    return %arg0, %c0_i32 : i32, i32
  }
  func.func @transform_5(%arg0: i32) -> (i32, i32) {
    %c0_i32 = arith.constant 0 : i32
    %c0_i32_0 = arith.constant 0 : i32
    return %arg0, %c0_i32 : i32, i32
  }
}

</mosaic_0001>

<llo_original>
// kernel: attention_forward.1
$region0: #{attention_forward.1}
  #allocation0 [shape = 'u32[]', space=smem, size = 0x4, offset = 0x4, fixed_abs, tag = 'smem constant byte address 0x4 - core index']
  #allocation1 [shape = 'u32[144,128]{1,0:T(1,128)}', space=vmem, size = 0x12000, scoped, tag = 'internal scratch']
  %s0 = inlined_call_operand.vmem [shape: f32[256,64], index: 0, kind: input, shape index: {}]
  %s1 = inlined_call_operand.vmem [shape: f32[32,16], index: 1, kind: input, shape index: {}]
  %s2 = inlined_call_operand.vmem [shape: f32[1,16], index: 2, kind: input, shape index: {}]
  %s3 = inlined_call_operand.vmem [shape: f32[1,16], index: 3, kind: input, shape index: {}]
  %s4 = inlined_call_operand.vmem [shape: f32[256,32], index: 4, kind: output, shape index: {0}]
  %s5 = inlined_call_operand.vmem [shape: f32[256,2], index: 5, kind: output, shape index: {1}]
  %6 = xla_tuple %s4, %s5
  %s7 = sld [smem:[#allocation0]]
  $region57: #{attention_forward.1} parent=0
    _
  %s9 = ssub.s32 1, %s7
  %s10 = scalar_select 0, %s9, %s7
  loop: start=0, step=1, limit=4
  $region2: #{attention_forward.1} parent=0 // loop_pre_header
    _
  $region3: #{attention_forward.1} parent=0 // loop_header
    %s12 = sphi 0, %s16
    %p13 = scmp.ge.s32.totalorder %s12, 4
    %s22 = sphi 0, %s24
    %s25 = sphi 0, %s22
    %s26 = sphi 0, %s25
    %s42 = sphi 0, %s26
    %s46 = sphi 0, %s46
    %s48 = sphi 0, %s46
    %s49 = sphi 0, %s48
    %s63 = sphi 0, %s49
    %s67 = sphi 0, %s67
    %s69 = sphi 0, %s67
    %s70 = sphi 0, %s69
    %s84 = sphi 0, %s70
    %s88 = sphi 0, %s88
    %s90 = sphi 0, %s88
    %s91 = sphi 0, %s90
    %s105 = sphi 0, %s91
    %s111 = sphi 0, %s113
    %s114 = sphi 0, %s111
    %s115 = sphi 0, %s114
    %s131 = sphi 0, %s115
    %s137 = sphi 0, %s139
    %s140 = sphi 0, %s137
    %s141 = sphi 0, %s140
    %s157 = sphi 0, %s141
  $region4: #{attention_forward.1} parent=0 // loop_header_branch
    %15 = sbr.rel (%p13) target = $region8
  $region5: #{attention_forward.1} parent=0 // loop_body
    %s17 = ssub.s32 %s12, 1
    %s18 = ssub.s32 %s12, 2
    %s19 = sadd.s32 %s12, 1
    %s20 = ssub.s32 %s12, %s19
    %p21 = scmp.eq.s32.totalorder %s20, 0
    %s23 = sadd.s32 %s22, 1
    %s24 = scalar_select %p21, %s22, %s23
    %p27 = pneg %p21
    %p28 = scmp.eq.s32.totalorder %s12, 1
    %p29 = por %p27, %p28
    %p30 = scmp.ne.s32.totalorder %s22, %s25
    %p31 = scmp.eq.s32.totalorder %s12, 0
    %p32 = por %p30, %p31
    %p33 = scmp.ne.s32.totalorder %s22, %s25
    %p34 = scmp.eq.s32.totalorder %s17, 1
    %p35 = por %p33, %p34
    %p36 = scmp.ne.s32.totalorder %s25, %s26
    %p37 = scmp.eq.s32.totalorder %s17, 0
    %p38 = por %p36, %p37
    %p39 = scmp.ne.s32.totalorder %s25, %s26
    %p40 = scmp.eq.s32.totalorder %s18, 1
    %p41 = por %p39, %p40
    %p43 = scmp.ne.s32.totalorder %s26, %s42
    %p44 = scmp.eq.s32.totalorder %s18, 0
    %p45 = por %p43, %p44
    %s47 = sadd.s32 %s46, 1
    %p50 = scmp.eq.s32.totalorder %s12, 1
    %p51 = scmp.ne.s32.totalorder %s46, %s48
    %p52 = scmp.eq.s32.totalorder %s12, 0
    %p53 = por %p51, %p52
    %p54 = scmp.ne.s32.totalorder %s46, %s48
    %p55 = scmp.eq.s32.totalorder %s17, 1
    %p56 = por %p54, %p55
    %p57 = scmp.ne.s32.totalorder %s48, %s49
    %p58 = scmp.eq.s32.totalorder %s17, 0
    %p59 = por %p57, %p58
    %p60 = scmp.ne.s32.totalorder %s48, %s49
    %p61 = scmp.eq.s32.totalorder %s18, 1
    %p62 = por %p60, %p61
    %p64 = scmp.ne.s32.totalorder %s49, %s63
    %p65 = scmp.eq.s32.totalorder %s18, 0
    %p66 = por %p64, %p65
    %s68 = sadd.s32 %s67, 1
    %p71 = scmp.eq.s32.totalorder %s12, 1
    %p72 = scmp.ne.s32.totalorder %s67, %s69
    %p73 = scmp.eq.s32.totalorder %s12, 0
    %p74 = por %p72, %p73
    %p75 = scmp.ne.s32.totalorder %s67, %s69
    %p76 = scmp.eq.s32.totalorder %s17, 1
    %p77 = por %p75, %p76
    %p78 = scmp.ne.s32.totalorder %s69, %s70
    %p79 = scmp.eq.s32.totalorder %s17, 0
    %p80 = por %p78, %p79
    %p81 = scmp.ne.s32.totalorder %s69, %s70
    %p82 = scmp.eq.s32.totalorder %s18, 1
    %p83 = por %p81, %p82
    %p85 = scmp.ne.s32.totalorder %s70, %s84
    %p86 = scmp.eq.s32.totalorder %s18, 0
    %p87 = por %p85, %p86
    %s89 = sadd.s32 %s88, 1
    %p92 = scmp.eq.s32.totalorder %s12, 1
    %p93 = scmp.ne.s32.totalorder %s88, %s90
    %p94 = scmp.eq.s32.totalorder %s12, 0
    %p95 = por %p93, %p94
    %p96 = scmp.ne.s32.totalorder %s88, %s90
    %p97 = scmp.eq.s32.totalorder %s17, 1
    %p98 = por %p96, %p97
    %p99 = scmp.ne.s32.totalorder %s90, %s91
    %p100 = scmp.eq.s32.totalorder %s17, 0
    %p101 = por %p99, %p100
    %p102 = scmp.ne.s32.totalorder %s90, %s91
    %p103 = scmp.eq.s32.totalorder %s18, 1
    %p104 = por %p102, %p103
    %p106 = scmp.ne.s32.totalorder %s91, %s105
    %p107 = scmp.eq.s32.totalorder %s18, 0
    %p108 = por %p106, %p107
    %s109 = ssub.s32 %s12, %s19
    %p110 = scmp.eq.s32.totalorder %s109, 0
    %s112 = sadd.s32 %s111, 1
    %s113 = scalar_select %p110, %s111, %s112
    %p116 = pneg %p110
    %p117 = scmp.eq.s32.totalorder %s12, 1
    %p118 = por %p116, %p117
    %p119 = scmp.ne.s32.totalorder %s111, %s114
    %p120 = scmp.eq.s32.totalorder %s12, 0
    %p121 = por %p119, %p120
    %p122 = scmp.ne.s32.totalorder %s111, %s114
    %p123 = scmp.eq.s32.totalorder %s17, 1
    %p124 = por %p122, %p123
    %p125 = scmp.ne.s32.totalorder %s114, %s115
    %p126 = scmp.eq.s32.totalorder %s17, 0
    %p127 = por %p125, %p126
    %p128 = scmp.ne.s32.totalorder %s114, %s115
    %p129 = scmp.eq.s32.totalorder %s18, 1
    %p130 = por %p128, %p129
    %p132 = scmp.ne.s32.totalorder %s115, %s131
    %p133 = scmp.eq.s32.totalorder %s18, 0
    %p134 = por %p132, %p133
    %s135 = ssub.s32 %s12, %s19
    %p136 = scmp.eq.s32.totalorder %s135, 0
    %s138 = sadd.s32 %s137, 1
    %s139 = scalar_select %p136, %s137, %s138
    %p142 = pneg %p136
    %p143 = scmp.eq.s32.totalorder %s12, 1
    %p144 = por %p142, %p143
    %p145 = scmp.ne.s32.totalorder %s137, %s140
    %p146 = scmp.eq.s32.totalorder %s12, 0
    %p147 = por %p145, %p146
    %p148 = scmp.ne.s32.totalorder %s137, %s140
    %p149 = scmp.eq.s32.totalorder %s17, 1
    %p150 = por %p148, %p149
    %p151 = scmp.ne.s32.totalorder %s140, %s141
    %p152 = scmp.eq.s32.totalorder %s17, 0
    %p153 = por %p151, %p152
    %p154 = scmp.ne.s32.totalorder %s140, %s141
    %p155 = scmp.eq.s32.totalorder %s18, 1
    %p156 = por %p154, %p155
    %p158 = scmp.ne.s32.totalorder %s141, %s157
    %p159 = scmp.eq.s32.totalorder %s18, 0
    %p160 = por %p158, %p159
    %p161 = scmp.le.s32.totalorder 1, %s12
    %p162 = scmp.lt.s32.totalorder %s12, 3
    %p163 = pnand %p161, %p162
    %p164 = pneg %p163
    // Predicated region
    $region9: #{attention_forward.1} parent=5 // pred_check
      _
    $region10: #{attention_forward.1} parent=5 // pred_check_branch
      %166 = sbr.rel (%p163) target = $region12
    $region11: #{attention_forward.1} parent=5 // pred_region
      %s167 = ssub.s32 %s12, 1
      // Predicated region
      $region13: #{attention_forward.1} parent=11 // pred_check
        %p168 = pneg %p59
      $region14: #{attention_forward.1} parent=11 // pred_check_branch
        %170 = sbr.rel (%p168) target = $region16
      $region15: #{attention_forward.1} parent=11 // pred_region
        _
      $region16: #{attention_forward.1} parent=11 // pred_fallthru
        _
      // Predicated region
      $region17: #{attention_forward.1} parent=11 // pred_check
        %p171 = pneg %p80
      $region18: #{attention_forward.1} parent=11 // pred_check_branch
        %173 = sbr.rel (%p171) target = $region20
      $region19: #{attention_forward.1} parent=11 // pred_region
        _
      $region20: #{attention_forward.1} parent=11 // pred_fallthru
        _
      // Predicated region
      $region21: #{attention_forward.1} parent=11 // pred_check
        %p174 = pneg %p101
      $region22: #{attention_forward.1} parent=11 // pred_check_branch
        %176 = sbr.rel (%p174) target = $region24
      $region23: #{attention_forward.1} parent=11 // pred_region
        _
      $region24: #{attention_forward.1} parent=11 // pred_fallthru
        _
    $region12: #{attention_forward.1} parent=5 // pred_fallthru
      _
    %p177 = scmp.lt.s32.totalorder %s12, 2
    // Predicated region
    $region25: #{attention_forward.1} parent=5 // pred_check
      %p178 = pneg %p177
    $region26: #{attention_forward.1} parent=5 // pred_check_branch
      %180 = sbr.rel (%p178) target = $region28
    $region27: #{attention_forward.1} parent=5 // pred_region
      // Predicated region
      $region29: #{attention_forward.1} parent=27 // pred_check
        %p181 = pneg %p32
      $region30: #{attention_forward.1} parent=27 // pred_check_branch
        %183 = sbr.rel (%p181) target = $region32
      $region31: #{attention_forward.1} parent=27 // pred_region
        %s184 = smul.u32 16, %s12
        %p185 = scmp.lt.s32.totalorder %s184, 31
        %s186 = scalar_select %p185, %s184, 31
        %s187 = smul.addr %s186, 8
        %s188 = scalar_lea.vmem %s0, %s187
        %s189 = smul.u32 16, %s12
      $region32: #{attention_forward.1} parent=27 // pred_fallthru
        _
    $region28: #{attention_forward.1} parent=5 // pred_fallthru
      _
    %p190 = scmp.le.s32.totalorder 1, %s12
    %p191 = scmp.lt.s32.totalorder %s12, 3
    %p192 = pnand %p190, %p191
    %p193 = pneg %p192
    // Predicated region
    $region33: #{attention_forward.1} parent=5 // pred_check
      _
    $region34: #{attention_forward.1} parent=5 // pred_check_branch
      %195 = sbr.rel (%p192) target = $region36
    $region35: #{attention_forward.1} parent=5 // pred_region
      %s196 = ssub.s32 %s12, 1
      %s197 = smul.u32 16, %s17
      %p198 = scmp.lt.s32.totalorder %s197, 31
      %s199 = scalar_select %p198, %s197, 31
      %s200 = smul.addr %s199, 8
      %s201 = scalar_lea.vmem %s0, %s200
      %p202 = pneg %p38
      %p203 = pneg %p35
      %p204 = pneg %p59
      %p205 = pneg %p56
      %p206 = pneg %p80
      %p207 = pneg %p77
      %p208 = pneg %p101
      %p209 = pneg %p98
      %p210 = pneg %p127
      %p211 = pneg %p124
      %s212 = smul.u32 16, %s17
      %p213 = scmp.lt.s32.totalorder %s212, 31
      %s214 = scalar_select %p213, %s212, 31
      %s215 = smul.addr %s214, 8
      %s216 = scalar_lea.vmem %s4, %s215
      %p217 = pneg %p153
      %p218 = pneg %p150
      %s219 = smul.u32 16, %s17
      %p220 = scmp.lt.s32.totalorder %s219, 31
      %s221 = scalar_select %p220, %s219, 31
      %s222 = smul.addr %s221, 8
      %s223 = scalar_lea.vmem %s5, %s222
      %s224 = smul.u32 16, %s17
      %p225 = scmp.lt.s32.totalorder %s224, 31
      %s226 = scalar_select %p225, %s224, 31
      %s227 = smul.addr %s226, 8
      %s228 = scalar_lea.vmem %s0, %s227
      %s229 = smul.u32 16, %s17
      %s230 = smul.u32 16, %s17
      %p231 = scmp.lt.s32.totalorder %s230, 31
      %s232 = scalar_select %p231, %s230, 31
      %s233 = smul.addr %s232, 8
      %s234 = scalar_lea.vmem %s4, %s233
      %s235 = smul.u32 16, %s17
      %s236 = smul.u32 16, %s17
      %p237 = scmp.lt.s32.totalorder %s236, 31
      %s238 = scalar_select %p237, %s236, 31
      %s239 = smul.addr %s238, 8
      %s240 = scalar_lea.vmem %s5, %s239
      %s241 = smul.u32 16, %s17
      %v242 = vld [vmem:[%s1] sm:$0xff]
      %v243 = vld [vmem:[%s1 + $0x8] sm:$0xff]
      %v244 = vld [vmem:[%s1 + $0x10] sm:$0xff]
      %v245 = vld [vmem:[%s1 + $0x18] sm:$0xff]
      %v246 = vld [vmem:[%s2] sm:$0x1]
      %v247 = vld [vmem:[%s3] sm:$0x1]
      %v248 = vld [vmem:[%s228] sm:$0xff]
      %v249 = vld [vmem:[%s228 + $0x8] sm:$0xff]
      %v250 = vld [vmem:[%s228 + $0x10] sm:$0xff]
      %v251 = vld [vmem:[%s228 + $0x18] sm:$0xff]
      %v252 = vld [vmem:[%s228 + $0x20] sm:$0xff]
      %v253 = vld [vmem:[%s228 + $0x28] sm:$0xff]
      %v254 = vld [vmem:[%s228 + $0x30] sm:$0xff]
      %v255 = vld [vmem:[%s228 + $0x38] sm:$0xff]
      %v256 = vld [vmem:[%s228 + $0x40] sm:$0xff]
      %v257 = vld [vmem:[%s228 + $0x48] sm:$0xff]
      %v258 = vld [vmem:[%s228 + $0x50] sm:$0xff]
      %v259 = vld [vmem:[%s228 + $0x58] sm:$0xff]
      %v260 = vld [vmem:[%s228 + $0x60] sm:$0xff]
      %v261 = vld [vmem:[%s228 + $0x68] sm:$0xff]
      %v262 = vld [vmem:[%s228 + $0x70] sm:$0xff]
      %v263 = vld [vmem:[%s228 + $0x78] sm:$0xff]
      %v265 = vlaneseq
      %v266 = vshrl.u32 %v265, 7
      %v267 = vsub.s32 0, %v266
      %v268 = vrot.slane %v246, %v267
      %vm270 = vcmask 261120
      %v272 = vsel %vm270, %v248, 0
      %v275 = vsel %vm270, %v249, 0
      %v278 = vsel %vm270, %v250, 0
      %v281 = vsel %vm270, %v251, 0
      %v284 = vsel %vm270, %v252, 0
      %v287 = vsel %vm270, %v253, 0
      %v290 = vsel %vm270, %v254, 0
      %v293 = vsel %vm270, %v255, 0
      %v296 = vsel %vm270, %v256, 0
      %v299 = vsel %vm270, %v257, 0
      %v302 = vsel %vm270, %v258, 0
      %v305 = vsel %vm270, %v259, 0
      %v308 = vsel %vm270, %v260, 0
      %v311 = vsel %vm270, %v261, 0
      %v314 = vsel %vm270, %v262, 0
      %v317 = vsel %vm270, %v263, 0
      %319 = vmatprep.subr.mxu0 0.0
      %320 = vmatpush1.msra.mxu0 %v242
      %321 = vmatprep.subr.mxu0 0.0
      %322 = vmatpush1.msra.mxu0 %v243
      %323 = vmatprep.subr.mxu0 0.0
      %324 = vmatpush1.msra.mxu0 %v244
      %325 = vmatprep.subr.mxu0 0.0
      %326 = vmatpush1.msra.mxu0 %v245
      %327 = vmatprep.subr.mxu0 0.0
      %328 = vmatpush1.msra.mxu0 0.0
      %329 = vmatprep.subr.mxu0 0.0
      %330 = vmatpush1.msra.mxu0 0.0
      %331 = vmatprep.subr.mxu0 0.0
      %332 = vmatpush1.msra.mxu0 0.0
      %333 = vmatprep.subr.mxu0 0.0
      %334 = vmatpush1.msra.mxu0 0.0
      %335 = vmatprep.subr.mxu0 0.0
      %336 = vmatpush1.msra.mxu0 0.0
      %337 = vmatprep.subr.mxu0 0.0
      %338 = vmatpush1.msra.mxu0 0.0
      %339 = vmatprep.subr.mxu0 0.0
      %340 = vmatpush1.msra.mxu0 0.0
      %341 = vmatprep.subr.mxu0 0.0
      %342 = vmatpush1.msra.mxu0 0.0
      %343 = vmatprep.subr.mxu0 0.0
      %344 = vmatpush1.msra.mxu0 0.0
      %345 = vmatprep.subr.mxu0 0.0
      %346 = vmatpush1.msra.mxu0 0.0
      %347 = vmatprep.subr.mxu0 0.0
      %348 = vmatpush1.msra.mxu0 0.0
      %349 = vmatprep.subr.mxu0 0.0
      %350 = vmatpush1.msra.mxu0 0.0
      %351 = vmatprep.subr.mxu0 0.0
      %352 = vmatpush1.msra.mxu0 0.0
      %353 = vmatprep.subr.mxu0 0.0
      %354 = vmatpush1.msra.mxu0 0.0
      %355 = vmatprep.subr.mxu0 0.0
      %356 = vmatpush1.msra.mxu0 0.0
      %357 = vmatprep.subr.mxu0 0.0
      %358 = vmatpush1.msra.mxu0 0.0
      %359 = vmatprep.subr.mxu0 0.0
      %360 = vmatpush1.msra.mxu0 0.0
      %361 = vmatprep.subr.mxu0 0.0
      %362 = vmatpush1.msra.mxu0 0.0
      %363 = vmatprep.subr.mxu0 0.0
      %364 = vmatpush1.msra.mxu0 0.0
      %365 = vmatprep.subr.mxu0 0.0
      %366 = vmatpush1.msra.mxu0 0.0
      %367 = vmatprep.subr.mxu0 0.0
      %368 = vmatpush1.msra.mxu0 0.0
      %369 = vmatprep.subr.mxu0 0.0
      %370 = vmatpush1.msra.mxu0 0.0
      %371 = vmatprep.subr.mxu0 0.0
      %372 = vmatpush1.msra.mxu0 0.0
      %373 = vmatprep.subr.mxu0 0.0
      %374 = vmatpush1.msra.mxu0 0.0
      %375 = vmatprep.subr.mxu0 0.0
      %376 = vmatpush1.msra.mxu0 0.0
      %377 = vmatprep.subr.mxu0 0.0
      %378 = vmatpush1.msra.mxu0 0.0
      %379 = vmatprep.subr.mxu0 0.0
      %380 = vmatpush1.msra.mxu0 0.0
      %381 = vmatprep.subr.mxu0 0.0
      %382 = vmatpush1.msra.mxu0 0.0
      %383 = vmatprep.mubr.f32.mxu0 0.0
      %384 = vmatmul.mubr.f32.gmra.mrb[0].mxu0 %v272
      %v385 = vpop.f32.mrb[0].mxu0
      %v386 = vadd.f32 %v268, %v385
      %v387 = vpop.f32.mrb[0].mxu0
      %388 = vmatprep.mubr.f32.mxu0 0.0
      %389 = vmatmul.mubr.f32.gmra.mrb[0].mxu0 %v275
      %v390 = vpop.f32.mrb[0].mxu0
      %v391 = vadd.f32 %v268, %v390
      %v392 = vpop.f32.mrb[0].mxu0
      %393 = vmatprep.mubr.f32.mxu0 0.0
      %394 = vmatmul.mubr.f32.gmra.mrb[0].mxu0 %v278
      %v395 = vpop.f32.mrb[0].mxu0
      %v396 = vadd.f32 %v268, %v395
      %v397 = vpop.f32.mrb[0].mxu0
      %398 = vmatprep.mubr.f32.mxu0 0.0
      %399 = vmatmul.mubr.f32.gmra.mrb[0].mxu0 %v281
      %v400 = vpop.f32.mrb[0].mxu0
      %v401 = vadd.f32 %v268, %v400
      %v402 = vpop.f32.mrb[0].mxu0
      %403 = vmatprep.mubr.f32.mxu0 0.0
      %404 = vmatmul.mubr.f32.gmra.mrb[0].mxu0 %v284
      %v405 = vpop.f32.mrb[0].mxu0
      %v406 = vadd.f32 %v268, %v405
      %v407 = vpop.f32.mrb[0].mxu0
      %408 = vmatprep.mubr.f32.mxu0 0.0
      %409 = vmatmul.mubr.f32.gmra.mrb[0].mxu0 %v287
      %v410 = vpop.f32.mrb[0].mxu0
      %v411 = vadd.f32 %v268, %v410
      %v412 = vpop.f32.mrb[0].mxu0
      %413 = vmatprep.mubr.f32.mxu0 0.0
      %414 = vmatmul.mubr.f32.gmra.mrb[0].mxu0 %v290
      %v415 = vpop.f32.mrb[0].mxu0
      %v416 = vadd.f32 %v268, %v415
      %v417 = vpop.f32.mrb[0].mxu0
      %418 = vmatprep.mubr.f32.mxu0 0.0
      %419 = vmatmul.mubr.f32.gmra.mrb[0].mxu0 %v293
      %v420 = vpop.f32.mrb[0].mxu0
      %v421 = vadd.f32 %v268, %v420
      %v422 = vpop.f32.mrb[0].mxu0
      %423 = vmatprep.mubr.f32.mxu0 0.0
      %424 = vmatmul.mubr.f32.gmra.mrb[0].mxu0 %v296
      %v425 = vpop.f32.mrb[0].mxu0
      %v426 = vadd.f32 %v268, %v425
      %v427 = vpop.f32.mrb[0].mxu0
      %428 = vmatprep.mubr.f32.mxu0 0.0
      %429 = vmatmul.mubr.f32.gmra.mrb[0].mxu0 %v299
      %v430 = vpop.f32.mrb[0].mxu0
      %v431 = vadd.f32 %v268, %v430
      %v432 = vpop.f32.mrb[0].mxu0
      %433 = vmatprep.mubr.f32.mxu0 0.0
      %434 = vmatmul.mubr.f32.gmra.mrb[0].mxu0 %v302
      %v435 = vpop.f32.mrb[0].mxu0
      %v436 = vadd.f32 %v268, %v435
      %v437 = vpop.f32.mrb[0].mxu0
      %438 = vmatprep.mubr.f32.mxu0 0.0
      %439 = vmatmul.mubr.f32.gmra.mrb[0].mxu0 %v305
      %v440 = vpop.f32.mrb[0].mxu0
      %v441 = vadd.f32 %v268, %v440
      %v442 = vpop.f32.mrb[0].mxu0
      %443 = vmatprep.mubr.f32.mxu0 0.0
      %444 = vmatmul.mubr.f32.gmra.mrb[0].mxu0 %v308
      %v445 = vpop.f32.mrb[0].mxu0
      %v446 = vadd.f32 %v268, %v445
      %v447 = vpop.f32.mrb[0].mxu0
      %448 = vmatprep.mubr.f32.mxu0 0.0
      %449 = vmatmul.mubr.f32.gmra.mrb[0].mxu0 %v311
      %v450 = vpop.f32.mrb[0].mxu0
      %v451 = vadd.f32 %v268, %v450
      %v452 = vpop.f32.mrb[0].mxu0
      %453 = vmatprep.mubr.f32.mxu0 0.0
      %454 = vmatmul.mubr.f32.gmra.mrb[0].mxu0 %v314
      %v455 = vpop.f32.mrb[0].mxu0
      %v456 = vadd.f32 %v268, %v455
      %v457 = vpop.f32.mrb[0].mxu0
      %458 = vmatprep.mubr.f32.mxu0 0.0
      %459 = vmatmul.mubr.f32.gmra.mrb[0].mxu0 %v317
      %v460 = vpop.f32.mrb[0].mxu0
      %v461 = vadd.f32 %v268, %v460
      %v462 = vpop.f32.mrb[0].mxu0
      %463 = vdwg.mxu0
      %v464 = vtanh.pop %v386
      %v465 = vtanh.pop %v391
      %v466 = vtanh.pop %v396
      %v467 = vtanh.pop %v401
      %v468 = vtanh.pop %v406
      %v469 = vtanh.pop %v411
      %v470 = vtanh.pop %v416
      %v471 = vtanh.pop %v421
      %v472 = vtanh.pop %v426
      %v473 = vtanh.pop %v431
      %v474 = vtanh.pop %v436
      %v475 = vtanh.pop %v441
      %v476 = vtanh.pop %v446
      %v477 = vtanh.pop %v451
      %v478 = vtanh.pop %v456
      %v479 = vtanh.pop %v461
      %v481 = vlaneseq
      %v482 = vshrl.u32 %v481, 7
      %v483 = vsub.s32 0, %v482
      %v484 = vrot.slane %v247, %v483
      %v486 = vmul.f32 %v464, %v484
      %v487 = vmul.f32 %v465, %v484
      %v488 = vmul.f32 %v466, %v484
      %v489 = vmul.f32 %v467, %v484
      %v490 = vmul.f32 %v468, %v484
      %v491 = vmul.f32 %v469, %v484
      %v492 = vmul.f32 %v470, %v484
      %v493 = vmul.f32 %v471, %v484
      %v494 = vmul.f32 %v472, %v484
      %v495 = vmul.f32 %v473, %v484
      %v496 = vmul.f32 %v474, %v484
      %v497 = vmul.f32 %v475, %v484
      %v498 = vmul.f32 %v476, %v484
      %v499 = vmul.f32 %v477, %v484
      %v500 = vmul.f32 %v478, %v484
      %v501 = vmul.f32 %v479, %v484
      %vm502 = vcmask 130048
      %v503 = vsel %vm502, %v486, 0.0
      %504 = vadd.xlane.f32.xlu0 %v503
      %v505 = vpop.xlane.xlu0 %504
      %v506 = vsel %vm502, %v487, 0.0
      %507 = vadd.xlane.f32.xlu0 %v506
      %v508 = vpop.xlane.xlu0 %507
      %v509 = vsel %vm502, %v488, 0.0
      %510 = vadd.xlane.f32.xlu0 %v509
      %v511 = vpop.xlane.xlu0 %510
      %v512 = vsel %vm502, %v489, 0.0
      %513 = vadd.xlane.f32.xlu0 %v512
      %v514 = vpop.xlane.xlu0 %513
      %v515 = vsel %vm502, %v490, 0.0
      %516 = vadd.xlane.f32.xlu0 %v515
      %v517 = vpop.xlane.xlu0 %516
      %v518 = vsel %vm502, %v491, 0.0
      %519 = vadd.xlane.f32.xlu0 %v518
      %v520 = vpop.xlane.xlu0 %519
      %v521 = vsel %vm502, %v492, 0.0
      %522 = vadd.xlane.f32.xlu0 %v521
      %v523 = vpop.xlane.xlu0 %522
      %v524 = vsel %vm502, %v493, 0.0
      %525 = vadd.xlane.f32.xlu0 %v524
      %v526 = vpop.xlane.xlu0 %525
      %v527 = vsel %vm502, %v494, 0.0
      %528 = vadd.xlane.f32.xlu0 %v527
      %v529 = vpop.xlane.xlu0 %528
      %v530 = vsel %vm502, %v495, 0.0
      %531 = vadd.xlane.f32.xlu0 %v530
      %v532 = vpop.xlane.xlu0 %531
      %v533 = vsel %vm502, %v496, 0.0
      %534 = vadd.xlane.f32.xlu0 %v533
      %v535 = vpop.xlane.xlu0 %534
      %v536 = vsel %vm502, %v497, 0.0
      %537 = vadd.xlane.f32.xlu0 %v536
      %v538 = vpop.xlane.xlu0 %537
      %v539 = vsel %vm502, %v498, 0.0
      %540 = vadd.xlane.f32.xlu0 %v539
      %v541 = vpop.xlane.xlu0 %540
      %v542 = vsel %vm502, %v499, 0.0
      %543 = vadd.xlane.f32.xlu0 %v542
      %v544 = vpop.xlane.xlu0 %543
      %v545 = vsel %vm502, %v500, 0.0
      %546 = vadd.xlane.f32.xlu0 %v545
      %v547 = vpop.xlane.xlu0 %546
      %v548 = vsel %vm502, %v501, 0.0
      %549 = vadd.xlane.f32.xlu0 %v548
      %v550 = vpop.xlane.xlu0 %549
      %551 = vrot.lane.b32.xlu0 %v248, 96
      %v552 = vpop.permute.xlu0 %551
      %553 = vrot.lane.b32.xlu0 %v249, 96
      %v554 = vpop.permute.xlu0 %553
      %555 = vrot.lane.b32.xlu0 %v250, 96
      %v556 = vpop.permute.xlu0 %555
      %557 = vrot.lane.b32.xlu0 %v251, 96
      %v558 = vpop.permute.xlu0 %557
      %559 = vrot.lane.b32.xlu0 %v252, 96
      %v560 = vpop.permute.xlu0 %559
      %561 = vrot.lane.b32.xlu0 %v253, 96
      %v562 = vpop.permute.xlu0 %561
      %563 = vrot.lane.b32.xlu0 %v254, 96
      %v564 = vpop.permute.xlu0 %563
      %565 = vrot.lane.b32.xlu0 %v255, 96
      %v566 = vpop.permute.xlu0 %565
      %567 = vrot.lane.b32.xlu0 %v256, 96
      %v568 = vpop.permute.xlu0 %567
      %569 = vrot.lane.b32.xlu0 %v257, 96
      %v570 = vpop.permute.xlu0 %569
      %571 = vrot.lane.b32.xlu0 %v258, 96
      %v572 = vpop.permute.xlu0 %571
      %573 = vrot.lane.b32.xlu0 %v259, 96
      %v574 = vpop.permute.xlu0 %573
      %575 = vrot.lane.b32.xlu0 %v260, 96
      %v576 = vpop.permute.xlu0 %575
      %577 = vrot.lane.b32.xlu0 %v261, 96
      %v578 = vpop.permute.xlu0 %577
      %579 = vrot.lane.b32.xlu0 %v262, 96
      %v580 = vpop.permute.xlu0 %579
      %581 = vrot.lane.b32.xlu0 %v263, 96
      %v582 = vpop.permute.xlu0 %581
      %v583 = vsel %vm270, %v552, 0
      %v585 = vsel %vm270, %v554, 0
      %v587 = vsel %vm270, %v556, 0
      %v589 = vsel %vm270, %v558, 0
      %v591 = vsel %vm270, %v560, 0
      %v593 = vsel %vm270, %v562, 0
      %v595 = vsel %vm270, %v564, 0
      %v597 = vsel %vm270, %v566, 0
      %v599 = vsel %vm270, %v568, 0
      %v601 = vsel %vm270, %v570, 0
      %v603 = vsel %vm270, %v572, 0
      %v605 = vsel %vm270, %v574, 0
      %v607 = vsel %vm270, %v576, 0
      %v609 = vsel %vm270, %v578, 0
      %v611 = vsel %vm270, %v580, 0
      %v613 = vsel %vm270, %v582, 0
      %615 = vmatprep.subr.mxu0 0.0
      %616 = vmatpush1.msra.mxu0 %v242
      %617 = vmatprep.subr.mxu0 0.0
      %618 = vmatpush1.msra.mxu0 %v243
      %619 = vmatprep.subr.mxu0 0.0
      %620 = vmatpush1.msra.mxu0 %v244
      %621 = vmatprep.subr.mxu0 0.0
      %622 = vmatpush1.msra.mxu0 %v245
      %623 = vmatprep.subr.mxu0 0.0
      %624 = vmatpush1.msra.mxu0 0.0
      %625 = vmatprep.subr.mxu0 0.0
      %626 = vmatpush1.msra.mxu0 0.0
      %627 = vmatprep.subr.mxu0 0.0
      %628 = vmatpush1.msra.mxu0 0.0
      %629 = vmatprep.subr.mxu0 0.0
      %630 = vmatpush1.msra.mxu0 0.0
      %631 = vmatprep.subr.mxu0 0.0
      %632 = vmatpush1.msra.mxu0 0.0
      %633 = vmatprep.subr.mxu0 0.0
      %634 = vmatpush1.msra.mxu0 0.0
      %635 = vmatprep.subr.mxu0 0.0
      %636 = vmatpush1.msra.mxu0 0.0
      %637 = vmatprep.subr.mxu0 0.0
      %638 = vmatpush1.msra.mxu0 0.0
      %639 = vmatprep.subr.mxu0 0.0
      %640 = vmatpush1.msra.mxu0 0.0
      %641 = vmatprep.subr.mxu0 0.0
      %642 = vmatpush1.msra.mxu0 0.0
      %643 = vmatprep.subr.mxu0 0.0
      %644 = vmatpush1.msra.mxu0 0.0
      %645 = vmatprep.subr.mxu0 0.0
      %646 = vmatpush1.msra.mxu0 0.0
      %647 = vmatprep.subr.mxu0 0.0
      %648 = vmatpush1.msra.mxu0 0.0
      %649 = vmatprep.subr.mxu0 0.0
      %650 = vmatpush1.msra.mxu0 0.0
      %651 = vmatprep.subr.mxu0 0.0
      %652 = vmatpush1.msra.mxu0 0.0
      %653 = vmatprep.subr.mxu0 0.0
      %654 = vmatpush1.msra.mxu0 0.0
      %655 = vmatprep.subr.mxu0 0.0
      %656 = vmatpush1.msra.mxu0 0.0
      %657 = vmatprep.subr.mxu0 0.0
      %658 = vmatpush1.msra.mxu0 0.0
      %659 = vmatprep.subr.mxu0 0.0
      %660 = vmatpush1.msra.mxu0 0.0
      %661 = vmatprep.subr.mxu0 0.0
      %662 = vmatpush1.msra.mxu0 0.0
      %663 = vmatprep.subr.mxu0 0.0
      %664 = vmatpush1.msra.mxu0 0.0
      %665 = vmatprep.subr.mxu0 0.0
      %666 = vmatpush1.msra.mxu0 0.0
      %667 = vmatprep.subr.mxu0 0.0
      %668 = vmatpush1.msra.mxu0 0.0
      %669 = vmatprep.subr.mxu0 0.0
      %670 = vmatpush1.msra.mxu0 0.0
      %671 = vmatprep.subr.mxu0 0.0
      %672 = vmatpush1.msra.mxu0 0.0
      %673 = vmatprep.subr.mxu0 0.0
      %674 = vmatpush1.msra.mxu0 0.0
      %675 = vmatprep.subr.mxu0 0.0
      %676 = vmatpush1.msra.mxu0 0.0
      %677 = vmatprep.subr.mxu0 0.0
      %678 = vmatpush1.msra.mxu0 0.0
      %679 = vmatprep.mubr.f32.mxu0 0.0
      %680 = vmatmul.mubr.f32.gmra.mrb[0].mxu0 %v583
      %v681 = vpop.f32.mrb[0].mxu0
      %v682 = vadd.f32 %v268, %v681
      %v683 = vpop.f32.mrb[0].mxu0
      %684 = vmatprep.mubr.f32.mxu0 0.0
      %685 = vmatmul.mubr.f32.gmra.mrb[0].mxu0 %v585
      %v686 = vpop.f32.mrb[0].mxu0
      %v687 = vadd.f32 %v268, %v686
      %v688 = vpop.f32.mrb[0].mxu0
      %689 = vmatprep.mubr.f32.mxu0 0.0
      %690 = vmatmul.mubr.f32.gmra.mrb[0].mxu0 %v587
      %v691 = vpop.f32.mrb[0].mxu0
      %v692 = vadd.f32 %v268, %v691
      %v693 = vpop.f32.mrb[0].mxu0
      %694 = vmatprep.mubr.f32.mxu0 0.0
      %695 = vmatmul.mubr.f32.gmra.mrb[0].mxu0 %v589
      %v696 = vpop.f32.mrb[0].mxu0
      %v697 = vadd.f32 %v268, %v696
      %v698 = vpop.f32.mrb[0].mxu0
      %699 = vmatprep.mubr.f32.mxu0 0.0
      %700 = vmatmul.mubr.f32.gmra.mrb[0].mxu0 %v591
      %v701 = vpop.f32.mrb[0].mxu0
      %v702 = vadd.f32 %v268, %v701
      %v703 = vpop.f32.mrb[0].mxu0
      %704 = vmatprep.mubr.f32.mxu0 0.0
      %705 = vmatmul.mubr.f32.gmra.mrb[0].mxu0 %v593
      %v706 = vpop.f32.mrb[0].mxu0
      %v707 = vadd.f32 %v268, %v706
      %v708 = vpop.f32.mrb[0].mxu0
      %709 = vmatprep.mubr.f32.mxu0 0.0
      %710 = vmatmul.mubr.f32.gmra.mrb[0].mxu0 %v595
      %v711 = vpop.f32.mrb[0].mxu0
      %v712 = vadd.f32 %v268, %v711
      %v713 = vpop.f32.mrb[0].mxu0
      %714 = vmatprep.mubr.f32.mxu0 0.0
      %715 = vmatmul.mubr.f32.gmra.mrb[0].mxu0 %v597
      %v716 = vpop.f32.mrb[0].mxu0
      %v717 = vadd.f32 %v268, %v716
      %v718 = vpop.f32.mrb[0].mxu0
      %719 = vmatprep.mubr.f32.mxu0 0.0
      %720 = vmatmul.mubr.f32.gmra.mrb[0].mxu0 %v599
      %v721 = vpop.f32.mrb[0].mxu0
      %v722 = vadd.f32 %v268, %v721
      %v723 = vpop.f32.mrb[0].mxu0
      %724 = vmatprep.mubr.f32.mxu0 0.0
      %725 = vmatmul.mubr.f32.gmra.mrb[0].mxu0 %v601
      %v726 = vpop.f32.mrb[0].mxu0
      %v727 = vadd.f32 %v268, %v726
      %v728 = vpop.f32.mrb[0].mxu0
      %729 = vmatprep.mubr.f32.mxu0 0.0
      %730 = vmatmul.mubr.f32.gmra.mrb[0].mxu0 %v603
      %v731 = vpop.f32.mrb[0].mxu0
      %v732 = vadd.f32 %v268, %v731
      %v733 = vpop.f32.mrb[0].mxu0
      %734 = vmatprep.mubr.f32.mxu0 0.0
      %735 = vmatmul.mubr.f32.gmra.mrb[0].mxu0 %v605
      %v736 = vpop.f32.mrb[0].mxu0
      %v737 = vadd.f32 %v268, %v736
      %v738 = vpop.f32.mrb[0].mxu0
      %739 = vmatprep.mubr.f32.mxu0 0.0
      %740 = vmatmul.mubr.f32.gmra.mrb[0].mxu0 %v607
      %v741 = vpop.f32.mrb[0].mxu0
      %v742 = vadd.f32 %v268, %v741
      %v743 = vpop.f32.mrb[0].mxu0
      %744 = vmatprep.mubr.f32.mxu0 0.0
      %745 = vmatmul.mubr.f32.gmra.mrb[0].mxu0 %v609
      %v746 = vpop.f32.mrb[0].mxu0
      %v747 = vadd.f32 %v268, %v746
      %v748 = vpop.f32.mrb[0].mxu0
      %749 = vmatprep.mubr.f32.mxu0 0.0
      %750 = vmatmul.mubr.f32.gmra.mrb[0].mxu0 %v611
      %v751 = vpop.f32.mrb[0].mxu0
      %v752 = vadd.f32 %v268, %v751
      %v753 = vpop.f32.mrb[0].mxu0
      %754 = vmatprep.mubr.f32.mxu0 0.0
      %755 = vmatmul.mubr.f32.gmra.mrb[0].mxu0 %v613
      %v756 = vpop.f32.mrb[0].mxu0
      %v757 = vadd.f32 %v268, %v756
      %v758 = vpop.f32.mrb[0].mxu0
      %759 = vdwg.mxu0
      %v760 = vtanh.pop %v682
      %v761 = vtanh.pop %v687
      %v762 = vtanh.pop %v692
      %v763 = vtanh.pop %v697
      %v764 = vtanh.pop %v702
      %v765 = vtanh.pop %v707
      %v766 = vtanh.pop %v712
      %v767 = vtanh.pop %v717
      %v768 = vtanh.pop %v722
      %v769 = vtanh.pop %v727
      %v770 = vtanh.pop %v732
      %v771 = vtanh.pop %v737
      %v772 = vtanh.pop %v742
      %v773 = vtanh.pop %v747
      %v774 = vtanh.pop %v752
      %v775 = vtanh.pop %v757
      %v776 = vmul.f32 %v760, %v484
      %v777 = vmul.f32 %v761, %v484
      %v778 = vmul.f32 %v762, %v484
      %v779 = vmul.f32 %v763, %v484
      %v780 = vmul.f32 %v764, %v484
      %v781 = vmul.f32 %v765, %v484
      %v782 = vmul.f32 %v766, %v484
      %v783 = vmul.f32 %v767, %v484
      %v784 = vmul.f32 %v768, %v484
      %v785 = vmul.f32 %v769, %v484
      %v786 = vmul.f32 %v770, %v484
      %v787 = vmul.f32 %v771, %v484
      %v788 = vmul.f32 %v772, %v484
      %v789 = vmul.f32 %v773, %v484
      %v790 = vmul.f32 %v774, %v484
      %v791 = vmul.f32 %v775, %v484
      %v792 = vsel %vm502, %v776, 0.0
      %793 = vadd.xlane.f32.xlu0 %v792
      %v794 = vpop.xlane.xlu0 %793
      %v795 = vsel %vm502, %v777, 0.0
      %796 = vadd.xlane.f32.xlu0 %v795
      %v797 = vpop.xlane.xlu0 %796
      %v798 = vsel %vm502, %v778, 0.0
      %799 = vadd.xlane.f32.xlu0 %v798
      %v800 = vpop.xlane.xlu0 %799
      %v801 = vsel %vm502, %v779, 0.0
      %802 = vadd.xlane.f32.xlu0 %v801
      %v803 = vpop.xlane.xlu0 %802
      %v804 = vsel %vm502, %v780, 0.0
      %805 = vadd.xlane.f32.xlu0 %v804
      %v806 = vpop.xlane.xlu0 %805
      %v807 = vsel %vm502, %v781, 0.0
      %808 = vadd.xlane.f32.xlu0 %v807
      %v809 = vpop.xlane.xlu0 %808
      %v810 = vsel %vm502, %v782, 0.0
      %811 = vadd.xlane.f32.xlu0 %v810
      %v812 = vpop.xlane.xlu0 %811
      %v813 = vsel %vm502, %v783, 0.0
      %814 = vadd.xlane.f32.xlu0 %v813
      %v815 = vpop.xlane.xlu0 %814
      %v816 = vsel %vm502, %v784, 0.0
      %817 = vadd.xlane.f32.xlu0 %v816
      %v818 = vpop.xlane.xlu0 %817
      %v819 = vsel %vm502, %v785, 0.0
      %820 = vadd.xlane.f32.xlu0 %v819
      %v821 = vpop.xlane.xlu0 %820
      %v822 = vsel %vm502, %v786, 0.0
      %823 = vadd.xlane.f32.xlu0 %v822
      %v824 = vpop.xlane.xlu0 %823
      %v825 = vsel %vm502, %v787, 0.0
      %826 = vadd.xlane.f32.xlu0 %v825
      %v827 = vpop.xlane.xlu0 %826
      %v828 = vsel %vm502, %v788, 0.0
      %829 = vadd.xlane.f32.xlu0 %v828
      %v830 = vpop.xlane.xlu0 %829
      %v831 = vsel %vm502, %v789, 0.0
      %832 = vadd.xlane.f32.xlu0 %v831
      %v833 = vpop.xlane.xlu0 %832
      %v834 = vsel %vm502, %v790, 0.0
      %835 = vadd.xlane.f32.xlu0 %v834
      %v836 = vpop.xlane.xlu0 %835
      %v837 = vsel %vm502, %v791, 0.0
      %838 = vadd.xlane.f32.xlu0 %v837
      %v839 = vpop.xlane.xlu0 %838
      %v840 = vmax.f32 %v505, %v794
      %v841 = vmax.f32 %v508, %v797
      %v842 = vmax.f32 %v511, %v800
      %v843 = vmax.f32 %v514, %v803
      %v844 = vmax.f32 %v517, %v806
      %v845 = vmax.f32 %v520, %v809
      %v846 = vmax.f32 %v523, %v812
      %v847 = vmax.f32 %v526, %v815
      %v848 = vmax.f32 %v529, %v818
      %v849 = vmax.f32 %v532, %v821
      %v850 = vmax.f32 %v535, %v824
      %v851 = vmax.f32 %v538, %v827
      %v852 = vmax.f32 %v541, %v830
      %v853 = vmax.f32 %v544, %v833
      %v854 = vmax.f32 %v547, %v836
      %v855 = vmax.f32 %v550, %v839
      %v856 = vsub.f32 %v505, %v840
      %v857 = vsub.f32 %v508, %v841
      %v858 = vsub.f32 %v511, %v842
      %v859 = vsub.f32 %v514, %v843
      %v860 = vsub.f32 %v517, %v844
      %v861 = vsub.f32 %v520, %v845
      %v862 = vsub.f32 %v523, %v846
      %v863 = vsub.f32 %v526, %v847
      %v864 = vsub.f32 %v529, %v848
      %v865 = vsub.f32 %v532, %v849
      %v866 = vsub.f32 %v535, %v850
      %v867 = vsub.f32 %v538, %v851
      %v868 = vsub.f32 %v541, %v852
      %v869 = vsub.f32 %v544, %v853
      %v870 = vsub.f32 %v547, %v854
      %v871 = vsub.f32 %v550, %v855
      %v872 = vmul.f32 %v856, 1.442695
      %v873 = vpow.pop %v872
      %v874 = vmul.f32 %v857, 1.442695
      %v875 = vpow.pop %v874
      %v876 = vmul.f32 %v858, 1.442695
      %v877 = vpow.pop %v876
      %v878 = vmul.f32 %v859, 1.442695
      %v879 = vpow.pop %v878
      %v880 = vmul.f32 %v860, 1.442695
      %v881 = vpow.pop %v880
      %v882 = vmul.f32 %v861, 1.442695
      %v883 = vpow.pop %v882
      %v884 = vmul.f32 %v862, 1.442695
      %v885 = vpow.pop %v884
      %v886 = vmul.f32 %v863, 1.442695
      %v887 = vpow.pop %v886
      %v888 = vmul.f32 %v864, 1.442695
      %v889 = vpow.pop %v888
      %v890 = vmul.f32 %v865, 1.442695
      %v891 = vpow.pop %v890
      %v892 = vmul.f32 %v866, 1.442695
      %v893 = vpow.pop %v892
      %v894 = vmul.f32 %v867, 1.442695
      %v895 = vpow.pop %v894
      %v896 = vmul.f32 %v868, 1.442695
      %v897 = vpow.pop %v896
      %v898 = vmul.f32 %v869, 1.442695
      %v899 = vpow.pop %v898
      %v900 = vmul.f32 %v870, 1.442695
      %v901 = vpow.pop %v900
      %v902 = vmul.f32 %v871, 1.442695
      %v903 = vpow.pop %v902
      %v904 = vsub.f32 %v794, %v840
      %v905 = vsub.f32 %v797, %v841
      %v906 = vsub.f32 %v800, %v842
      %v907 = vsub.f32 %v803, %v843
      %v908 = vsub.f32 %v806, %v844
      %v909 = vsub.f32 %v809, %v845
      %v910 = vsub.f32 %v812, %v846
      %v911 = vsub.f32 %v815, %v847
      %v912 = vsub.f32 %v818, %v848
      %v913 = vsub.f32 %v821, %v849
      %v914 = vsub.f32 %v824, %v850
      %v915 = vsub.f32 %v827, %v851
      %v916 = vsub.f32 %v830, %v852
      %v917 = vsub.f32 %v833, %v853
      %v918 = vsub.f32 %v836, %v854
      %v919 = vsub.f32 %v839, %v855
      %v920 = vmul.f32 %v904, 1.442695
      %v921 = vpow.pop %v920
      %v922 = vmul.f32 %v905, 1.442695
      %v923 = vpow.pop %v922
      %v924 = vmul.f32 %v906, 1.442695
      %v925 = vpow.pop %v924
      %v926 = vmul.f32 %v907, 1.442695
      %v927 = vpow.pop %v926
      %v928 = vmul.f32 %v908, 1.442695
      %v929 = vpow.pop %v928
      %v930 = vmul.f32 %v909, 1.442695
      %v931 = vpow.pop %v930
      %v932 = vmul.f32 %v910, 1.442695
      %v933 = vpow.pop %v932
      %v934 = vmul.f32 %v911, 1.442695
      %v935 = vpow.pop %v934
      %v936 = vmul.f32 %v912, 1.442695
      %v937 = vpow.pop %v936
      %v938 = vmul.f32 %v913, 1.442695
      %v939 = vpow.pop %v938
      %v940 = vmul.f32 %v914, 1.442695
      %v941 = vpow.pop %v940
      %v942 = vmul.f32 %v915, 1.442695
      %v943 = vpow.pop %v942
      %v944 = vmul.f32 %v916, 1.442695
      %v945 = vpow.pop %v944
      %v946 = vmul.f32 %v917, 1.442695
      %v947 = vpow.pop %v946
      %v948 = vmul.f32 %v918, 1.442695
      %v949 = vpow.pop %v948
      %v950 = vmul.f32 %v919, 1.442695
      %v951 = vpow.pop %v950
      %v952 = vadd.f32 %v873, %v921
      %v953 = vadd.f32 %v875, %v923
      %v954 = vadd.f32 %v877, %v925
      %v955 = vadd.f32 %v879, %v927
      %v956 = vadd.f32 %v881, %v929
      %v957 = vadd.f32 %v883, %v931
      %v958 = vadd.f32 %v885, %v933
      %v959 = vadd.f32 %v887, %v935
      %v960 = vadd.f32 %v889, %v937
      %v961 = vadd.f32 %v891, %v939
      %v962 = vadd.f32 %v893, %v941
      %v963 = vadd.f32 %v895, %v943
      %v964 = vadd.f32 %v897, %v945
      %v965 = vadd.f32 %v899, %v947
      %v966 = vadd.f32 %v901, %v949
      %v967 = vadd.f32 %v903, %v951
      %v968 = vrcp.pop %v952
      %v969 = vmul.f32 1.0, %v968
      %v970 = vrcp.pop %v953
      %v971 = vmul.f32 1.0, %v970
      %v972 = vrcp.pop %v954
      %v973 = vmul.f32 1.0, %v972
      %v974 = vrcp.pop %v955
      %v975 = vmul.f32 1.0, %v974
      %v976 = vrcp.pop %v956
      %v977 = vmul.f32 1.0, %v976
      %v978 = vrcp.pop %v957
      %v979 = vmul.f32 1.0, %v978
      %v980 = vrcp.pop %v958
      %v981 = vmul.f32 1.0, %v980
      %v982 = vrcp.pop %v959
      %v983 = vmul.f32 1.0, %v982
      %v984 = vrcp.pop %v960
      %v985 = vmul.f32 1.0, %v984
      %v986 = vrcp.pop %v961
      %v987 = vmul.f32 1.0, %v986
      %v988 = vrcp.pop %v962
      %v989 = vmul.f32 1.0, %v988
      %v990 = vrcp.pop %v963
      %v991 = vmul.f32 1.0, %v990
      %v992 = vrcp.pop %v964
      %v993 = vmul.f32 1.0, %v992
      %v994 = vrcp.pop %v965
      %v995 = vmul.f32 1.0, %v994
      %v996 = vrcp.pop %v966
      %v997 = vmul.f32 1.0, %v996
      %v998 = vrcp.pop %v967
      %v999 = vmul.f32 1.0, %v998
      %v1000 = vmul.f32 %v873, %v969
      %v1001 = vmul.f32 %v875, %v971
      %v1002 = vmul.f32 %v877, %v973
      %v1003 = vmul.f32 %v879, %v975
      %v1004 = vmul.f32 %v881, %v977
      %v1005 = vmul.f32 %v883, %v979
      %v1006 = vmul.f32 %v885, %v981
      %v1007 = vmul.f32 %v887, %v983
      %v1008 = vmul.f32 %v889, %v985
      %v1009 = vmul.f32 %v891, %v987
      %v1010 = vmul.f32 %v893, %v989
      %v1011 = vmul.f32 %v895, %v991
      %v1012 = vmul.f32 %v897, %v993
      %v1013 = vmul.f32 %v899, %v995
      %v1014 = vmul.f32 %v901, %v997
      %v1015 = vmul.f32 %v903, %v999
      %vm1016 = vcmask 7168
      %1017 = vst.msk [vmem:[%s240] sm:$0xff] %vm1016, %v1000
      %1018 = vst.msk [vmem:[%s240 + $0x8] sm:$0xff] %vm1016, %v1001
      %1019 = vst.msk [vmem:[%s240 + $0x10] sm:$0xff] %vm1016, %v1002
      %1020 = vst.msk [vmem:[%s240 + $0x18] sm:$0xff] %vm1016, %v1003
      %1021 = vst.msk [vmem:[%s240 + $0x20] sm:$0xff] %vm1016, %v1004
      %1022 = vst.msk [vmem:[%s240 + $0x28] sm:$0xff] %vm1016, %v1005
      %1023 = vst.msk [vmem:[%s240 + $0x30] sm:$0xff] %vm1016, %v1006
      %1024 = vst.msk [vmem:[%s240 + $0x38] sm:$0xff] %vm1016, %v1007
      %1025 = vst.msk [vmem:[%s240 + $0x40] sm:$0xff] %vm1016, %v1008
      %1026 = vst.msk [vmem:[%s240 + $0x48] sm:$0xff] %vm1016, %v1009
      %1027 = vst.msk [vmem:[%s240 + $0x50] sm:$0xff] %vm1016, %v1010
      %1028 = vst.msk [vmem:[%s240 + $0x58] sm:$0xff] %vm1016, %v1011
      %1029 = vst.msk [vmem:[%s240 + $0x60] sm:$0xff] %vm1016, %v1012
      %1030 = vst.msk [vmem:[%s240 + $0x68] sm:$0xff] %vm1016, %v1013
      %1031 = vst.msk [vmem:[%s240 + $0x70] sm:$0xff] %vm1016, %v1014
      %1032 = vst.msk [vmem:[%s240 + $0x78] sm:$0xff] %vm1016, %v1015
      %v1033 = vmul.f32 %v1000, %v248
      %v1034 = vmul.f32 %v1001, %v249
      %v1035 = vmul.f32 %v1002, %v250
      %v1036 = vmul.f32 %v1003, %v251
      %v1037 = vmul.f32 %v1004, %v252
      %v1038 = vmul.f32 %v1005, %v253
      %v1039 = vmul.f32 %v1006, %v254
      %v1040 = vmul.f32 %v1007, %v255
      %v1041 = vmul.f32 %v1008, %v256
      %v1042 = vmul.f32 %v1009, %v257
      %v1043 = vmul.f32 %v1010, %v258
      %v1044 = vmul.f32 %v1011, %v259
      %v1045 = vmul.f32 %v1012, %v260
      %v1046 = vmul.f32 %v1013, %v261
      %v1047 = vmul.f32 %v1014, %v262
      %v1048 = vmul.f32 %v1015, %v263
      %v1049 = vadd.f32 %v1033, 0.0
      %v1050 = vadd.f32 %v1034, 0.0
      %v1051 = vadd.f32 %v1035, 0.0
      %v1052 = vadd.f32 %v1036, 0.0
      %v1053 = vadd.f32 %v1037, 0.0
      %v1054 = vadd.f32 %v1038, 0.0
      %v1055 = vadd.f32 %v1039, 0.0
      %v1056 = vadd.f32 %v1040, 0.0
      %v1057 = vadd.f32 %v1041, 0.0
      %v1058 = vadd.f32 %v1042, 0.0
      %v1059 = vadd.f32 %v1043, 0.0
      %v1060 = vadd.f32 %v1044, 0.0
      %v1061 = vadd.f32 %v1045, 0.0
      %v1062 = vadd.f32 %v1046, 0.0
      %v1063 = vadd.f32 %v1047, 0.0
      %v1064 = vadd.f32 %v1048, 0.0
      %v1065 = vmul.f32 %v921, %v969
      %v1066 = vmul.f32 %v923, %v971
      %v1067 = vmul.f32 %v925, %v973
      %v1068 = vmul.f32 %v927, %v975
      %v1069 = vmul.f32 %v929, %v977
      %v1070 = vmul.f32 %v931, %v979
      %v1071 = vmul.f32 %v933, %v981
      %v1072 = vmul.f32 %v935, %v983
      %v1073 = vmul.f32 %v937, %v985
      %v1074 = vmul.f32 %v939, %v987
      %v1075 = vmul.f32 %v941, %v989
      %v1076 = vmul.f32 %v943, %v991
      %v1077 = vmul.f32 %v945, %v993
      %v1078 = vmul.f32 %v947, %v995
      %v1079 = vmul.f32 %v949, %v997
      %v1080 = vmul.f32 %v951, %v999
      %vm1081 = vcmask 15368
      %1082 = vst.msk [vmem:[%s240] sm:$0xff] %vm1081, %v1065
      %1083 = vst.msk [vmem:[%s240 + $0x8] sm:$0xff] %vm1081, %v1066
      %1084 = vst.msk [vmem:[%s240 + $0x10] sm:$0xff] %vm1081, %v1067
      %1085 = vst.msk [vmem:[%s240 + $0x18] sm:$0xff] %vm1081, %v1068
      %1086 = vst.msk [vmem:[%s240 + $0x20] sm:$0xff] %vm1081, %v1069
      %1087 = vst.msk [vmem:[%s240 + $0x28] sm:$0xff] %vm1081, %v1070
      %1088 = vst.msk [vmem:[%s240 + $0x30] sm:$0xff] %vm1081, %v1071
      %1089 = vst.msk [vmem:[%s240 + $0x38] sm:$0xff] %vm1081, %v1072
      %1090 = vst.msk [vmem:[%s240 + $0x40] sm:$0xff] %vm1081, %v1073
      %1091 = vst.msk [vmem:[%s240 + $0x48] sm:$0xff] %vm1081, %v1074
      %1092 = vst.msk [vmem:[%s240 + $0x50] sm:$0xff] %vm1081, %v1075
      %1093 = vst.msk [vmem:[%s240 + $0x58] sm:$0xff] %vm1081, %v1076
      %1094 = vst.msk [vmem:[%s240 + $0x60] sm:$0xff] %vm1081, %v1077
      %1095 = vst.msk [vmem:[%s240 + $0x68] sm:$0xff] %vm1081, %v1078
      %1096 = vst.msk [vmem:[%s240 + $0x70] sm:$0xff] %vm1081, %v1079
      %1097 = vst.msk [vmem:[%s240 + $0x78] sm:$0xff] %vm1081, %v1080
      %v1098 = vmul.f32 %v1065, %v248
      %v1099 = vmul.f32 %v1066, %v249
      %v1100 = vmul.f32 %v1067, %v250
      %v1101 = vmul.f32 %v1068, %v251
      %v1102 = vmul.f32 %v1069, %v252
      %v1103 = vmul.f32 %v1070, %v253
      %v1104 = vmul.f32 %v1071, %v254
      %v1105 = vmul.f32 %v1072, %v255
      %v1106 = vmul.f32 %v1073, %v256
      %v1107 = vmul.f32 %v1074, %v257
      %v1108 = vmul.f32 %v1075, %v258
      %v1109 = vmul.f32 %v1076, %v259
      %v1110 = vmul.f32 %v1077, %v260
      %v1111 = vmul.f32 %v1078, %v261
      %v1112 = vmul.f32 %v1079, %v262
      %v1113 = vmul.f32 %v1080, %v263
      %1130 = vrot.lane.b32.xlu0 %v1098, 96
      %v1131 = vpop.permute.xlu0 %1130
      %1132 = vrot.lane.b32.xlu0 %v1099, 96
      %v1133 = vpop.permute.xlu0 %1132
      %1134 = vrot.lane.b32.xlu0 %v1100, 96
      %v1135 = vpop.permute.xlu0 %1134
      %1136 = vrot.lane.b32.xlu0 %v1101, 96
      %v1137 = vpop.permute.xlu0 %1136
      %1138 = vrot.lane.b32.xlu0 %v1102, 96
      %v1139 = vpop.permute.xlu0 %1138
      %1140 = vrot.lane.b32.xlu0 %v1103, 96
      %v1141 = vpop.permute.xlu0 %1140
      %1142 = vrot.lane.b32.xlu0 %v1104, 96
      %v1143 = vpop.permute.xlu0 %1142
      %1144 = vrot.lane.b32.xlu0 %v1105, 96
      %v1145 = vpop.permute.xlu0 %1144
      %1146 = vrot.lane.b32.xlu0 %v1106, 96
      %v1147 = vpop.permute.xlu0 %1146
      %1148 = vrot.lane.b32.xlu0 %v1107, 96
      %v1149 = vpop.permute.xlu0 %1148
      %1150 = vrot.lane.b32.xlu0 %v1108, 96
      %v1151 = vpop.permute.xlu0 %1150
      %1152 = vrot.lane.b32.xlu0 %v1109, 96
      %v1153 = vpop.permute.xlu0 %1152
      %1154 = vrot.lane.b32.xlu0 %v1110, 96
      %v1155 = vpop.permute.xlu0 %1154
      %1156 = vrot.lane.b32.xlu0 %v1111, 96
      %v1157 = vpop.permute.xlu0 %1156
      %1158 = vrot.lane.b32.xlu0 %v1112, 96
      %v1159 = vpop.permute.xlu0 %1158
      %1160 = vrot.lane.b32.xlu0 %v1113, 96
      %v1161 = vpop.permute.xlu0 %1160
      %v1178 = vadd.f32 %v1049, %v1131
      %v1179 = vadd.f32 %v1050, %v1133
      %v1180 = vadd.f32 %v1051, %v1135
      %v1181 = vadd.f32 %v1052, %v1137
      %v1182 = vadd.f32 %v1053, %v1139
      %v1183 = vadd.f32 %v1054, %v1141
      %v1184 = vadd.f32 %v1055, %v1143
      %v1185 = vadd.f32 %v1056, %v1145
      %v1186 = vadd.f32 %v1057, %v1147
      %v1187 = vadd.f32 %v1058, %v1149
      %v1188 = vadd.f32 %v1059, %v1151
      %v1189 = vadd.f32 %v1060, %v1153
      %v1190 = vadd.f32 %v1061, %v1155
      %v1191 = vadd.f32 %v1062, %v1157
      %v1192 = vadd.f32 %v1063, %v1159
      %v1193 = vadd.f32 %v1064, %v1161
      %1194 = vst.msk [vmem:[%s234] sm:$0xff] %vm270, %v1178
      %1195 = vst.msk [vmem:[%s234 + $0x8] sm:$0xff] %vm270, %v1179
      %1196 = vst.msk [vmem:[%s234 + $0x10] sm:$0xff] %vm270, %v1180
      %1197 = vst.msk [vmem:[%s234 + $0x18] sm:$0xff] %vm270, %v1181
      %1198 = vst.msk [vmem:[%s234 + $0x20] sm:$0xff] %vm270, %v1182
      %1199 = vst.msk [vmem:[%s234 + $0x28] sm:$0xff] %vm270, %v1183
      %1200 = vst.msk [vmem:[%s234 + $0x30] sm:$0xff] %vm270, %v1184
      %1201 = vst.msk [vmem:[%s234 + $0x38] sm:$0xff] %vm270, %v1185
      %1202 = vst.msk [vmem:[%s234 + $0x40] sm:$0xff] %vm270, %v1186
      %1203 = vst.msk [vmem:[%s234 + $0x48] sm:$0xff] %vm270, %v1187
      %1204 = vst.msk [vmem:[%s234 + $0x50] sm:$0xff] %vm270, %v1188
      %1205 = vst.msk [vmem:[%s234 + $0x58] sm:$0xff] %vm270, %v1189
      %1206 = vst.msk [vmem:[%s234 + $0x60] sm:$0xff] %vm270, %v1190
      %1207 = vst.msk [vmem:[%s234 + $0x68] sm:$0xff] %vm270, %v1191
      %1208 = vst.msk [vmem:[%s234 + $0x70] sm:$0xff] %vm270, %v1192
      %1209 = vst.msk [vmem:[%s234 + $0x78] sm:$0xff] %vm270, %v1193
      %s1210 = smul.u32 16, %s17
      %p1211 = scmp.lt.s32.totalorder %s1210, 31
      %s1212 = scalar_select %p1211, %s1210, 31
      %s1213 = smul.addr %s1212, 8
      %s1214 = scalar_lea.vmem %s4, %s1213
      %s1215 = smul.u32 16, %s17
      %p1216 = scmp.lt.s32.totalorder %s1215, 31
      %s1217 = scalar_select %p1216, %s1215, 31
      %s1218 = smul.addr %s1217, 8
      %s1219 = scalar_lea.vmem %s5, %s1218
      // Predicated region
      $region37: #{attention_forward.1} parent=35 // pred_check
        %p1220 = pneg %p124
      $region38: #{attention_forward.1} parent=35 // pred_check_branch
        %1222 = sbr.rel (%p1220) target = $region40
      $region39: #{attention_forward.1} parent=35 // pred_region
        %s1223 = smul.u32 16, %s17
      $region40: #{attention_forward.1} parent=35 // pred_fallthru
        _
      // Predicated region
      $region41: #{attention_forward.1} parent=35 // pred_check
        %p1224 = pneg %p150
      $region42: #{attention_forward.1} parent=35 // pred_check_branch
        %1226 = sbr.rel (%p1224) target = $region44
      $region43: #{attention_forward.1} parent=35 // pred_region
        %s1227 = smul.u32 16, %s17
      $region44: #{attention_forward.1} parent=35 // pred_fallthru
        _
    $region36: #{attention_forward.1} parent=5 // pred_fallthru
      _
    %p1228 = scmp.le.s32.totalorder 2, %s12
    // Predicated region
    $region45: #{attention_forward.1} parent=5 // pred_check
      %p1229 = pneg %p1228
    $region46: #{attention_forward.1} parent=5 // pred_check_branch
      %1231 = sbr.rel (%p1229) target = $region48
    $region47: #{attention_forward.1} parent=5 // pred_region
      %s1232 = ssub.s32 %s12, 2
      // Predicated region
      $region49: #{attention_forward.1} parent=47 // pred_check
        %p1233 = pneg %p130
      $region50: #{attention_forward.1} parent=47 // pred_check_branch
        %1235 = sbr.rel (%p1233) target = $region52
      $region51: #{attention_forward.1} parent=47 // pred_region
        %s1236 = smul.u32 16, %s18
        %p1237 = scmp.lt.s32.totalorder %s1236, 31
        %s1238 = scalar_select %p1237, %s1236, 31
        %s1239 = smul.addr %s1238, 8
        %s1240 = scalar_lea.vmem %s4, %s1239
      $region52: #{attention_forward.1} parent=47 // pred_fallthru
        _
      // Predicated region
      $region53: #{attention_forward.1} parent=47 // pred_check
        %p1241 = pneg %p156
      $region54: #{attention_forward.1} parent=47 // pred_check_branch
        %1243 = sbr.rel (%p1241) target = $region56
      $region55: #{attention_forward.1} parent=47 // pred_region
        %s1244 = smul.u32 16, %s18
        %p1245 = scmp.lt.s32.totalorder %s1244, 31
        %s1246 = scalar_select %p1245, %s1244, 31
        %s1247 = smul.addr %s1246, 8
        %s1248 = scalar_lea.vmem %s5, %s1247
      $region56: #{attention_forward.1} parent=47 // pred_fallthru
        _
    $region48: #{attention_forward.1} parent=5 // pred_fallthru
      _
  $region6: #{attention_forward.1} parent=0 // loop_footer
    %s16 = sadd.s32 1, %s12
  $region7: #{attention_forward.1} parent=0 // loop_footer_branch
    %11 = sbr.rel target = $region3
  $region8: #{attention_forward.1} parent=0 // loop_exit
    _

</llo_original>
